<compile_context>
chip_gen: v7x
topology: tpu7x:2x2x1
jax: 0.10.0
libtpu: 0.0.40
codegen_flags: <defaults>
</compile_context>

<pallas_src>
import jax
import jax.numpy as jnp
from jax.experimental import pallas as pl
from jax.experimental.pallas import tpu as pltpu


def _round_up(x, n):
    return ((x + n - 1) // n) * n


def _vmem_capacity_bytes():
    """Physical VMEM per TensorCore; conservative fallback if the query fails."""
    try:
        info = pltpu.get_tpu_info()
        cap = getattr(info, "vmem_capacity_bytes", None)
        if cap:
            return int(cap)
    except Exception:
        pass
    return 64 << 20  # v7x-sized fallback (safe on every generation)


def _tile_candidates(dim_p):
    """128-multiple tile sizes that divide dim_p, largest first."""
    cands = []
    for t in (dim_p, 2048, 1024, 512, 256, 128):
        if t <= dim_p and dim_p % t == 0 and t not in cands:
            cands.append(t)
    return cands


def _ffn_kernel(x_ref, w1_ref, b1_ref, w2_ref, b2_ref, o_ref, h_ref, acc_ref):
    """One (i, k, j) grid step.  i = row tile, k = d_ff chunk, j = d_model tile.

    x_ref  : (tm, d_x_p)      activation row tile i            (compute dtype)
    w1_ref : (d_x_p, tkf)     W1^T chunk k                     (compute dtype)
    b1_ref : (1, tkf)         b1 chunk k                       (f32)
    w2_ref : (tkf, tn)        W2^T chunk (k, j)                (compute dtype)
    b2_ref : (1, tn)          b2 chunk j                       (f32)
    o_ref  : (tm, tn)         output tile (i, j), written at the last k step
    h_ref  : (tm, tkf)        layer-1 cache for chunk k        (compute dtype)
    acc_ref: (grid_j, tm, tn) f32 layer-2 accumulator over k, one slot per j tile
    """
    k = pl.program_id(1)
    j = pl.program_id(2)

    # Layer 1 for this (row tile, d_ff chunk): computed once (j == 0) and reused for
    # every output-column tile j -- no layer-1 recompute, no extra w1 HBM streaming
    # (the w1 block index does not change while j iterates, so it is not re-fetched).
    @pl.when(j == 0)
    def _():
        h = jnp.dot(x_ref[...], w1_ref[...], preferred_element_type=jnp.float32)
        h = jnp.maximum(h + b1_ref[...], 0.0)
        # bf16 h-cache halves scratch; switch h_ref to f32 if tighter accuracy needed.
        h_ref[...] = h.astype(h_ref.dtype)

    contrib = jnp.dot(h_ref[...], w2_ref[...], preferred_element_type=jnp.float32)

    @pl.when(k == 0)
    def _():
        acc_ref[j] = contrib

    @pl.when(k > 0)
    def _():
        acc_ref[j] = acc_ref[j] + contrib

    @pl.when(k == pl.num_programs(1) - 1)
    def _():
        o_ref[...] = (acc_ref[j] + b2_ref[...]).astype(o_ref.dtype)


def prepare_ffn_params(w1, b1, w2, b2, *, compute_dtype=jnp.bfloat16):
    """One-time parameter prep (do NOT call per forward pass).

    Casts to the compute dtype, transposes to the MXU-native (in, out) layout and
    zero-pads every feature dim to a multiple of 128 so all kernel tiles are
    lane-dense.  Input is PyTorch nn.Linear layout: w1 (d_ff, d_x), w2 (d_model, d_ff).
    """
    d_ff, d_x = w1.shape
    d_model = w2.shape[0]
    d_x_p = _round_up(d_x, 128)
    d_ff_p = _round_up(d_ff, 128)
    d_model_p = _round_up(d_model, 128)

    w1t = jnp.pad(jnp.transpose(w1).astype(compute_dtype),
                  ((0, d_x_p - d_x), (0, d_ff_p - d_ff)))
    b1p = jnp.pad(b1.astype(jnp.float32), (0, d_ff_p - d_ff)).reshape(1, d_ff_p)
    w2t = jnp.pad(jnp.transpose(w2).astype(compute_dtype),
                  ((0, d_ff_p - d_ff), (0, d_model_p - d_model)))
    b2p = jnp.pad(b2.astype(jnp.float32), (0, d_model_p - d_model)).reshape(1, d_model_p)

    return dict(w1t=w1t, b1=b1p, w2t=w2t, b2=b2p,
                d_x=d_x, d_ff=d_ff, d_model=d_model,
                d_x_p=d_x_p, d_ff_p=d_ff_p, d_model_p=d_model_p,
                compute_dtype=compute_dtype)


def pointwise_ffn(x, params, *, tm=None, tn_max=None, tkf_max=None):
    """Fused Linear(d_x->d_ff) -> ReLU -> Linear(d_ff->d_model), point-wise over x.

    `params` must come from prepare_ffn_params (pre-cast / transposed / padded, so the
    per-call parameter work is zero).  tm / tn_max / tkf_max are optional overrides
    (mainly for testing multi-tile grids).
    """
    cdt = params["compute_dtype"]
    out_dtype = x.dtype
    d_x, d_x_p = params["d_x"], params["d_x_p"]
    d_ff_p = params["d_ff_p"]
    d_model, d_model_p = params["d_model"], params["d_model_p"]

    lead = x.shape[:-1]
    assert x.shape[-1] == d_x
    m = 1
    for s in lead:
        m *= int(s)

    x2 = x.reshape(m, d_x).astype(cdt)
    if d_x_p != d_x:
        x2 = jnp.pad(x2, ((0, 0), (0, d_x_p - d_x)))

    csize = jnp.dtype(cdt).itemsize
    osize = jnp.dtype(out_dtype).itemsize

    # ---- Generation-aware VMEM budget ---------------------------------------------
    vmem_cap = _vmem_capacity_bytes()
    vmem_limit = min(max(vmem_cap - (16 << 20), 32 << 20), 100 << 20)
    tile_budget = vmem_limit - (8 << 20)  # headroom for Mosaic internal scratch

    # ---- Tile selection -------------------------------------------------------------
    tm_max = 512 if vmem_limit >= (96 << 20) else 256
    if tm is None:
        if m > tm_max:
            tm = tm_max
        elif m >= 256:
            # Keep grid_i >= 2 so the 'parallel' row axis can be sharded across
            # TensorCores (v7x has 2 TCs per chip).
            tm = _round_up((m + 1) // 2, 8)
        else:
            tm = m

    def footprint(tm_, tn_, tkf_):
        gj_ = d_model_p // tn_
        blocks = 2 * (tm_ * d_x_p * csize        # x tile          (double-buffered)
                      + d_x_p * tkf_ * csize     # W1^T chunk
                      + tkf_ * 4                 # b1 chunk
                      + tkf_ * tn_ * csize       # W2^T chunk
                      + tn_ * 4                  # b2 chunk
                      + tm_ * tn_ * osize)       # output tile
        scratch = tm_ * tkf_ * csize + gj_ * tm_ * tn_ * 4   # h cache + f32 accumulator
        temps = tm_ * tkf_ * 4 + tm_ * tn_ * 4               # in-kernel f32 temporaries
        return blocks + scratch + temps

    tn_cands = [t for t in _tile_candidates(d_model_p) if tn_max is None or t <= tn_max]
    tkf_cands = [t for t in _tile_candidates(d_ff_p) if tkf_max is None or t <= tkf_max]

    chosen = None
    for tn_c in tn_cands:            # prefer full-width d_model (single j tile, no revisits)
        for tkf_c in tkf_cands:      # then the biggest d_ff chunk that fits
            if footprint(tm, tn_c, tkf_c) <= tile_budget:
                chosen = (tn_c, tkf_c)
                break
        if chosen is not None:
            break
    if chosen is None:
        tn, tkf = 128, 128
        while tm > 8 and footprint(tm, tn, tkf) > tile_budget:
            tm = max(8, _round_up(tm // 2, 8))
    else:
        tn, tkf = chosen

    grid_i = pl.cdiv(m, tm)
    grid_k = d_ff_p // tkf
    grid_j = d_model_p // tn
    grid = (grid_i, grid_k, grid_j)

    # ---- Cost estimate (matches executed work) --------------------------------------
    m_exec = grid_i * tm
    flops = 2 * m_exec * d_ff_p * (d_x_p + d_model_p)
    bytes_accessed = (
        m_exec * d_x_p * csize                       # x, fetched once per row tile
        + grid_i * d_x_p * d_ff_p * csize            # W1^T, streamed once per row tile
        + grid_i * d_ff_p * 4                        # b1
        + grid_i * d_ff_p * d_model_p * csize        # W2^T, streamed once per row tile
        + grid_i * grid_k * d_model_p * 4            # b2
        + m_exec * d_model_p * osize * (grid_k if grid_j > 1 else 1))  # output writebacks

    out2 = pl.pallas_call(
        _ffn_kernel,
        out_shape=jax.ShapeDtypeStruct((m, d_model_p), out_dtype),
        grid_spec=pltpu.PrefetchScalarGridSpec(
            num_scalar_prefetch=0,
            grid=grid,
            in_specs=[
                pl.BlockSpec((tm, d_x_p), lambda i, k, j: (i, 0)),    # x row tile
                pl.BlockSpec((d_x_p, tkf), lambda i, k, j: (0, k)),   # W1^T chunk
                pl.BlockSpec((1, tkf), lambda i, k, j: (0, k)),       # b1 chunk
                pl.BlockSpec((tkf, tn), lambda i, k, j: (k, j)),      # W2^T chunk
                pl.BlockSpec((1, tn), lambda i, k, j: (0, j)),        # b2 chunk
            ],
            out_specs=pl.BlockSpec((tm, tn), lambda i, k, j: (i, j)),
            scratch_shapes=[
                pltpu.VMEM((tm, tkf), cdt),                  # layer-1 cache
                pltpu.VMEM((grid_j, tm, tn), jnp.float32),   # layer-2 accumulator
            ],
        ),
        compiler_params=pltpu.CompilerParams(
            # j shares the layer-1 cache, so only the row axis is megacore-parallel.
            dimension_semantics=("parallel", "arbitrary", "arbitrary"),
            vmem_limit_bytes=int(vmem_limit),
        ),
        cost_estimate=pl.CostEstimate(
            flops=int(flops), transcendentals=0, bytes_accessed=int(bytes_accessed)),
    )(x2, params["w1t"], params["b1"], params["w2t"], params["b2"])

    if d_model_p != d_model:
        out2 = out2[:, :d_model]
    return out2.reshape(*lead, d_model)


def init_params(key, d_x, d_ff, d_model, dtype=jnp.float32):
    """Deterministic init mimicking torch.nn.Linear (U[-1/sqrt(fan_in), 1/sqrt(fan_in)])."""
    k1, k2, k3, k4 = jax.random.split(key, 4)
    bound1 = 1.0 / (d_x ** 0.5)
    bound2 = 1.0 / (d_ff ** 0.5)
    w1 = jax.random.uniform(k1, (d_ff, d_x), dtype, -bound1, bound1)
    b1 = jax.random.uniform(k2, (d_ff,), dtype, -bound1, bound1)
    w2 = jax.random.uniform(k3, (d_model, d_ff), dtype, -bound2, bound2)
    b2 = jax.random.uniform(k4, (d_model,), dtype, -bound2, bound2)
    return w1, b1, w2, b2


if __name__ == "__main__":
    key = jax.random.PRNGKey(0)

    # ---- Test 1: toy shapes from the module spec (exercises the padding paths) ----
    batch, seq, d_x, d_ff, d_model = 2, 8, 16, 32, 16
    kx, kp, key = jax.random.split(key, 3)
    x = jax.random.normal(kx, (batch, seq, d_x), dtype=jnp.float32)
    w1, b1, w2, b2 = init_params(kp, d_x, d_ff, d_model)
    params = prepare_ffn_params(w1, b1, w2, b2)   # one-time prep (cast/transpose/pad)
    out = jax.block_until_ready(pointwise_ffn(x, params))
    ref = jnp.maximum(x @ w1.T + b1, 0.0) @ w2.T + b2
    assert out.shape == (batch, seq, d_model)
    assert jnp.allclose(out, ref, atol=5e-2, rtol=5e-2)

    # ---- Test 2: force a multi-tile grid (grid_i, grid_k, grid_j all > 1) to
    # exercise the h-cache reuse across j, the f32 accumulator and output revisits. ----
    batch2, seq2, d_x2, d_ff2, d_model2 = 2, 96, 128, 384, 256
    kx2, kp2 = jax.random.split(key)
    x_big = jax.random.normal(kx2, (batch2, seq2, d_x2), dtype=jnp.float32)
    w1b, b1b, w2b, b2b = init_params(kp2, d_x2, d_ff2, d_model2)
    params2 = prepare_ffn_params(w1b, b1b, w2b, b2b)
    out_big = jax.block_until_ready(
        pointwise_ffn(x_big, params2, tm=64, tn_max=128, tkf_max=128))
    ref_big = jnp.maximum(x_big @ w1b.T + b1b, 0.0) @ w2b.T + b2b
    assert out_big.shape == (batch2, seq2, d_model2)
    assert jnp.allclose(out_big, ref_big, atol=5e-2, rtol=5e-2)

    print("KERNEL_OK")
</pallas_src>

<mosaic_0001>
module attributes {stable_mosaic.version = 11 : i64} {
  func.func @_ffn_kernel(%arg0: i32, %arg1: i32, %arg2: i32, %arg3: memref<16x128xbf16, #tpu.memory_space<vmem>>, %arg4: memref<128x128xbf16, #tpu.memory_space<vmem>>, %arg5: memref<1x128xf32, #tpu.memory_space<vmem>>, %arg6: memref<128x128xbf16, #tpu.memory_space<vmem>>, %arg7: memref<1x128xf32, #tpu.memory_space<vmem>>, %arg8: memref<16x128xf32, #tpu.memory_space<vmem>>, %arg9: memref<16x128xbf16, #tpu.memory_space<vmem>>, %arg10: memref<1x16x128xf32, #tpu.memory_space<vmem>>) attributes {dimension_semantics = [#tpu.dimension_semantics<parallel>, #tpu.dimension_semantics<arbitrary>, #tpu.dimension_semantics<arbitrary>], iteration_bounds = array<i64: 1, 1, 1>, scalar_prefetch = 0 : i64, scratch_operands = 2 : i64, tpu.core_type = #tpu.core_type<tc>, window_params = [{transform_indices = @transform_0, window_bounds = array<i64: 16, 128>}, {transform_indices = @transform_1, window_bounds = array<i64: 128, 128>}, {transform_indices = @transform_2, window_bounds = array<i64: 1, 128>}, {transform_indices = @transform_3, window_bounds = array<i64: 128, 128>}, {transform_indices = @transform_4, window_bounds = array<i64: 1, 128>}, {transform_indices = @transform_5, window_bounds = array<i64: 16, 128>}]} {
    %c0_i32 = arith.constant 0 : i32
    %0 = arith.cmpi eq, %arg2, %c0_i32 : i32
    %1 = arith.extui %0 : i1 to i32
    %c0_i32_0 = arith.constant 0 : i32
    %2 = arith.cmpi ne, %1, %c0_i32_0 : i32
    scf.if %2 {
      %c0_10 = arith.constant 0 : index
      %c0_11 = arith.constant 0 : index
      %15 = vector.load %arg3[%c0_10, %c0_11] : memref<16x128xbf16, #tpu.memory_space<vmem>>, vector<16x128xbf16>
      %c0_12 = arith.constant 0 : index
      %c0_13 = arith.constant 0 : index
      %16 = vector.load %arg4[%c0_12, %c0_13] : memref<128x128xbf16, #tpu.memory_space<vmem>>, vector<128x128xbf16>
      %cst_14 = arith.constant dense<0.000000e+00> : vector<16x128xf32>
      %17 = tpu.matmul %15, %16, %cst_14 {dimension_numbers = #tpu.dot_dimension_numbers<[1], [0], [0], [1], [0, 0, 1, 1], [], []>} : vector<16x128xbf16>, vector<128x128xbf16>, vector<16x128xf32> -> vector<16x128xf32>
      %c0_15 = arith.constant 0 : index
      %c0_16 = arith.constant 0 : index
      %18 = vector.load %arg5[%c0_15, %c0_16] : memref<1x128xf32, #tpu.memory_space<vmem>>, vector<1x128xf32>
      %19 = vector.broadcast %18 : vector<1x128xf32> to vector<16x128xf32>
      %20 = arith.addf %17, %19 : vector<16x128xf32>
      %cst_17 = arith.constant 0.000000e+00 : f32
      %21 = vector.broadcast %cst_17 : f32 to vector<16x128xf32>
      %22 = arith.maximumf %20, %21 : vector<16x128xf32>
      %23 = arith.truncf %22 : vector<16x128xf32> to vector<16x128xbf16>
      %c0_18 = arith.constant 0 : index
      %c0_19 = arith.constant 0 : index
      %24 = vector.load %arg9[%c0_18, %c0_19] : memref<16x128xbf16, #tpu.memory_space<vmem>>, vector<16x128xbf16>
      tpu.vector_store %arg9[%c0_18, %c0_19], %23 {strides = array<i32>} : memref<16x128xbf16, #tpu.memory_space<vmem>>, vector<16x128xbf16>,
    } else {
    }
    %c0 = arith.constant 0 : index
    %c0_1 = arith.constant 0 : index
    %3 = vector.load %arg9[%c0, %c0_1] : memref<16x128xbf16, #tpu.memory_space<vmem>>, vector<16x128xbf16>
    %c0_2 = arith.constant 0 : index
    %c0_3 = arith.constant 0 : index
    %4 = vector.load %arg6[%c0_2, %c0_3] : memref<128x128xbf16, #tpu.memory_space<vmem>>, vector<128x128xbf16>
    %cst = arith.constant dense<0.000000e+00> : vector<16x128xf32>
    %5 = tpu.matmul %3, %4, %cst {dimension_numbers = #tpu.dot_dimension_numbers<[1], [0], [0], [1], [0, 0, 1, 1], [], []>} : vector<16x128xbf16>, vector<128x128xbf16>, vector<16x128xf32> -> vector<16x128xf32>
    %c0_i32_4 = arith.constant 0 : i32
    %6 = arith.cmpi eq, %arg1, %c0_i32_4 : i32
    %7 = arith.extui %6 : i1 to i32
    %c0_i32_5 = arith.constant 0 : i32
    %8 = arith.cmpi ne, %7, %c0_i32_5 : i32
    scf.if %8 {
      %15 = arith.index_cast %arg2 : i32 to index
      %c0_10 = arith.constant 0 : index
      %c0_11 = arith.constant 0 : index
      %16 = vector.load %arg10[%15, %c0_10, %c0_11] : memref<1x16x128xf32, #tpu.memory_space<vmem>>, vector<1x16x128xf32>
      %17 = vector.shape_cast %16 : vector<1x16x128xf32> to vector<16x128xf32>
      %18 = vector.shape_cast %5 : vector<16x128xf32> to vector<1x16x128xf32>
      tpu.vector_store %arg10[%15, %c0_10, %c0_11], %18 {strides = array<i32>} : memref<1x16x128xf32, #tpu.memory_space<vmem>>, vector<1x16x128xf32>,
    } else {
    }
    %c0_i32_6 = arith.constant 0 : i32
    %9 = arith.cmpi sgt, %arg1, %c0_i32_6 : i32
    %10 = arith.extui %9 : i1 to i32
    %c0_i32_7 = arith.constant 0 : i32
    %11 = arith.cmpi ne, %10, %c0_i32_7 : i32
    scf.if %11 {
      %15 = arith.index_cast %arg2 : i32 to index
      %c0_10 = arith.constant 0 : index
      %c0_11 = arith.constant 0 : index
      %16 = vector.load %arg10[%15, %c0_10, %c0_11] : memref<1x16x128xf32, #tpu.memory_space<vmem>>, vector<1x16x128xf32>
      %17 = vector.shape_cast %16 : vector<1x16x128xf32> to vector<16x128xf32>
      %18 = arith.addf %17, %5 : vector<16x128xf32>
      %19 = arith.index_cast %arg2 : i32 to index
      %c0_12 = arith.constant 0 : index
      %c0_13 = arith.constant 0 : index
      %20 = vector.load %arg10[%19, %c0_12, %c0_13] : memref<1x16x128xf32, #tpu.memory_space<vmem>>, vector<1x16x128xf32>
      %21 = vector.shape_cast %20 : vector<1x16x128xf32> to vector<16x128xf32>
      %22 = vector.shape_cast %18 : vector<16x128xf32> to vector<1x16x128xf32>
      tpu.vector_store %arg10[%19, %c0_12, %c0_13], %22 {strides = array<i32>} : memref<1x16x128xf32, #tpu.memory_space<vmem>>, vector<1x16x128xf32>,
    } else {
    }
    %c0_i32_8 = arith.constant 0 : i32
    %12 = arith.cmpi eq, %arg1, %c0_i32_8 : i32
    %13 = arith.extui %12 : i1 to i32
    %c0_i32_9 = arith.constant 0 : i32
    %14 = arith.cmpi ne, %13, %c0_i32_9 : i32
    scf.if %14 {
      %15 = arith.index_cast %arg2 : i32 to index
      %c0_10 = arith.constant 0 : index
      %c0_11 = arith.constant 0 : index
      %16 = vector.load %arg10[%15, %c0_10, %c0_11] : memref<1x16x128xf32, #tpu.memory_space<vmem>>, vector<1x16x128xf32>
      %17 = vector.shape_cast %16 : vector<1x16x128xf32> to vector<16x128xf32>
      %c0_12 = arith.constant 0 : index
      %c0_13 = arith.constant 0 : index
      %18 = vector.load %arg7[%c0_12, %c0_13] : memref<1x128xf32, #tpu.memory_space<vmem>>, vector<1x128xf32>
      %19 = vector.broadcast %18 : vector<1x128xf32> to vector<16x128xf32>
      %20 = arith.addf %17, %19 : vector<16x128xf32>
      %c0_14 = arith.constant 0 : index
      %c0_15 = arith.constant 0 : index
      %21 = vector.load %arg8[%c0_14, %c0_15] : memref<16x128xf32, #tpu.memory_space<vmem>>, vector<16x128xf32>
      tpu.vector_store %arg8[%c0_14, %c0_15], %20 {strides = array<i32>} : memref<16x128xf32, #tpu.memory_space<vmem>>, vector<16x128xf32>,
    } else {
    }
    return
  }
  func.func @transform_0(%arg0: i32, %arg1: i32, %arg2: i32) -> (i32, i32) {
    %c0_i32 = arith.constant 0 : i32
    %c0_i32_0 = arith.constant 0 : i32
    return %arg0, %c0_i32 : i32, i32
  }
  func.func @transform_1(%arg0: i32, %arg1: i32, %arg2: i32) -> (i32, i32) {
    %c0_i32 = arith.constant 0 : i32
    %c0_i32_0 = arith.constant 0 : i32
    return %c0_i32, %arg1 : i32, i32
  }
  func.func @transform_2(%arg0: i32, %arg1: i32, %arg2: i32) -> (i32, i32) {
    %c0_i32 = arith.constant 0 : i32
    %c0_i32_0 = arith.constant 0 : i32
    return %c0_i32, %arg1 : i32, i32
  }
  func.func @transform_3(%arg0: i32, %arg1: i32, %arg2: i32) -> (i32, i32) {
    %c0_i32 = arith.constant 0 : i32
    return %arg1, %arg2 : i32, i32
  }
  func.func @transform_4(%arg0: i32, %arg1: i32, %arg2: i32) -> (i32, i32) {
    %c0_i32 = arith.constant 0 : i32
    %c0_i32_0 = arith.constant 0 : i32
    return %c0_i32, %arg2 : i32, i32
  }
  func.func @transform_5(%arg0: i32, %arg1: i32, %arg2: i32) -> (i32, i32) {
    %c0_i32 = arith.constant 0 : i32
    return %arg0, %arg2 : i32, i32
  }
}

</mosaic_0001>

<llo_original>
// kernel: tpu_custom_call.1
$region0: #{tpu_custom_call.1}
  #allocation0 [shape = 'u32[]', space=smem, size = 0x4, offset = 0x4, fixed_abs, tag = 'smem constant byte address 0x4 - core index']
  #allocation1 [shape = 'u32[144,128]{1,0:T(1,128)}', space=vmem, size = 0x12000, scoped, tag = 'internal scratch']
  #allocation2 [shape = 'bf16[16,128]{1,0:T(16,128)(2,1)}', space=vmem, size = 0x1000, scoped, tag = 'scratch operand']
  #allocation3 [shape = 'f32[1,16,128]{2,1,0:T(8,128)}', space=vmem, size = 0x2000, scoped, tag = 'scratch operand']
  %s0 = inlined_call_operand.hbm [shape: bf16[16,128], index: 0, kind: input, shape index: {}]
  %s1 = inlined_call_operand.hbm [shape: bf16[128,128], index: 1, kind: input, shape index: {}]
  %s2 = inlined_call_operand.vmem [shape: f32[1,128], index: 2, kind: input, shape index: {}]
  %s3 = inlined_call_operand.hbm [shape: bf16[128,128], index: 3, kind: input, shape index: {}]
  %s4 = inlined_call_operand.vmem [shape: f32[1,128], index: 4, kind: input, shape index: {}]
  %s5 = inlined_call_operand.hbm [shape: f32[16,128], index: 5, kind: output, shape index: {}]
  %s6 = sld [smem:[#allocation0]]
  $region58: #{tpu_custom_call.1} parent=0
    _
  %s8 = ssub.s32 1, %s6
  %s9 = scalar_select 0, %s8, %s6
  $region1: #{tpu_custom_call.1} parent=0
    #allocation4 [shape = 'u8[4096]{0}', space=vmem, size = 0x1000, scoped, tag = 'input window, operand 0, single buffered']
    #allocation5 [shape = 's32[1]{0}', space=sflag, size = 0x4, scoped, tag = 'scoped memory for tpu_custom_call.1']
    #allocation6 [shape = 's32[1]{0}', space=sflag, size = 0x4, scoped, tag = 'scoped memory for tpu_custom_call.1']
    #allocation7 [shape = 'u8[32768]{0}', space=vmem, size = 0x8000, scoped, tag = 'input window, operand 1, single buffered']
    #allocation8 [shape = 's32[1]{0}', space=sflag, size = 0x4, scoped, tag = 'scoped memory for tpu_custom_call.1']
    #allocation9 [shape = 'u8[32768]{0}', space=vmem, size = 0x8000, scoped, tag = 'input window, operand 3, single buffered']
    #allocation10 [shape = 'u8[8192]{0}', space=vmem, size = 0x2000, scoped, tag = 'output window, operand 0, single buffered']
    %10 = vsyncpa [#allocation5], 0
    %11 = vsyncpa [#allocation8], 0
    %12 = vsyncpa [#allocation6], 0
    // Predicated region
    $region2: #{tpu_custom_call.1} parent=1 // pred_check
      _
    $region3: #{tpu_custom_call.1} parent=1 // pred_check_branch
      %14 = sbr.rel (0) target = $region5
    $region4: #{tpu_custom_call.1} parent=1 // pred_region
      %s16 = ssub.s32 128, 128
      %17 = vsyncadd [#allocation5], %s16
      %s18 = sshll.u32 [#allocation4], 4
      %s19 = int_to_ptr.vmem [resolvable:$true] %s18
      %24 = dma.hbm_to_vmem [thread:$0]  %s0, 128, %s19, [#allocation5], 64, 64, 4
    $region5: #{tpu_custom_call.1} parent=1 // pred_fallthru
      _
    // Predicated region
    $region6: #{tpu_custom_call.1} parent=1 // pred_check
      _
    $region7: #{tpu_custom_call.1} parent=1 // pred_check_branch
      %26 = sbr.rel (0) target = $region9
    $region8: #{tpu_custom_call.1} parent=1 // pred_region
      %s28 = ssub.s32 1024, 1024
      %29 = vsyncadd [#allocation8], %s28
      %s30 = sshll.u32 [#allocation7], 4
      %s31 = int_to_ptr.vmem [resolvable:$true] %s30
      %36 = dma.hbm_to_vmem [thread:$0]  %s1, 1024, %s31, [#allocation8], 64, 64, 4
    $region9: #{tpu_custom_call.1} parent=1 // pred_fallthru
      _
    // Predicated region
    $region10: #{tpu_custom_call.1} parent=1 // pred_check
      _
    $region11: #{tpu_custom_call.1} parent=1 // pred_check_branch
      %38 = sbr.rel (0) target = $region13
    $region12: #{tpu_custom_call.1} parent=1 // pred_region
      _
    $region13: #{tpu_custom_call.1} parent=1 // pred_fallthru
      _
    // Predicated region
    $region14: #{tpu_custom_call.1} parent=1 // pred_check
      _
    $region15: #{tpu_custom_call.1} parent=1 // pred_check_branch
      %40 = sbr.rel (0) target = $region17
    $region16: #{tpu_custom_call.1} parent=1 // pred_region
      %s42 = ssub.s32 1024, 1024
      %43 = vsyncadd [#allocation8], %s42
      %s44 = sshll.u32 [#allocation9], 4
      %s45 = int_to_ptr.vmem [resolvable:$true] %s44
      %50 = dma.hbm_to_vmem [thread:$0]  %s3, 1024, %s45, [#allocation8], 64, 64, 4
    $region17: #{tpu_custom_call.1} parent=1 // pred_fallthru
      _
    // Predicated region
    $region18: #{tpu_custom_call.1} parent=1 // pred_check
      _
    $region19: #{tpu_custom_call.1} parent=1 // pred_check_branch
      %52 = sbr.rel (0) target = $region21
    $region20: #{tpu_custom_call.1} parent=1 // pred_region
      _
    $region21: #{tpu_custom_call.1} parent=1 // pred_fallthru
      _
    // Predicated region
    $region22: #{tpu_custom_call.1} parent=1 // pred_check
      _
    $region23: #{tpu_custom_call.1} parent=1 // pred_check_branch
      %54 = sbr.rel (0) target = $region25
    $region24: #{tpu_custom_call.1} parent=1 // pred_region
      %55 = dma.done [#allocation5], 128
    $region25: #{tpu_custom_call.1} parent=1 // pred_fallthru
      _
    // Predicated region
    $region26: #{tpu_custom_call.1} parent=1 // pred_check
      _
    $region27: #{tpu_custom_call.1} parent=1 // pred_check_branch
      %57 = sbr.rel (0) target = $region29
    $region28: #{tpu_custom_call.1} parent=1 // pred_region
      %58 = dma.done [#allocation8], 1024
    $region29: #{tpu_custom_call.1} parent=1 // pred_fallthru
      _
    // Predicated region
    $region30: #{tpu_custom_call.1} parent=1 // pred_check
      _
    $region31: #{tpu_custom_call.1} parent=1 // pred_check_branch
      %60 = sbr.rel (0) target = $region33
    $region32: #{tpu_custom_call.1} parent=1 // pred_region
      %61 = dma.done [#allocation8], 1024
    $region33: #{tpu_custom_call.1} parent=1 // pred_fallthru
      _
    %p63 = scmp.eq.s32.totalorder 0, 0
    // Predicated region
    $region34: #{tpu_custom_call.1} parent=1 // pred_check
      %p64 = pneg %p63
    $region35: #{tpu_custom_call.1} parent=1 // pred_check_branch
      %66 = sbr.rel (%p64) target = $region37
    $region36: #{tpu_custom_call.1} parent=1 // pred_region
      %v67 = vld [vmem:[#allocation4] sm:$0xf]
      %v68 = vld [vmem:[#allocation4 + $0x4] sm:$0xf]
      %v69 = vld [vmem:[#allocation7] sm:$0xf]
      %v70 = vld [vmem:[#allocation7 + $0x4] sm:$0xf]
      %v71 = vld [vmem:[#allocation7 + $0x8] sm:$0xf]
      %v72 = vld [vmem:[#allocation7 + $0xc] sm:$0xf]
      %v73 = vld [vmem:[#allocation7 + $0x10] sm:$0xf]
      %v74 = vld [vmem:[#allocation7 + $0x14] sm:$0xf]
      %v75 = vld [vmem:[#allocation7 + $0x18] sm:$0xf]
      %v76 = vld [vmem:[#allocation7 + $0x1c] sm:$0xf]
      %v77 = vld [vmem:[#allocation7 + $0x20] sm:$0xf]
      %v78 = vld [vmem:[#allocation7 + $0x24] sm:$0xf]
      %v79 = vld [vmem:[#allocation7 + $0x28] sm:$0xf]
      %v80 = vld [vmem:[#allocation7 + $0x2c] sm:$0xf]
      %v81 = vld [vmem:[#allocation7 + $0x30] sm:$0xf]
      %v82 = vld [vmem:[#allocation7 + $0x34] sm:$0xf]
      %v83 = vld [vmem:[#allocation7 + $0x38] sm:$0xf]
      %v84 = vld [vmem:[#allocation7 + $0x3c] sm:$0xf]
      %v85 = vld [vmem:[%s2] sm:$0x1]
      %v87 = vlaneseq
      %v88 = vshrl.u32 %v87, 7
      %v89 = vsub.s32 0, %v88
      %v90 = vrot.slane %v85, %v89
      %v94 = vunpack.c.l.b16 %v67
      %v95 = vunpack.c.l.b16 %v68
      %v96 = vpack.c.b16 %v95, %v94
      %v114 = vunpack.c.l.b16 %v69
      %v115 = vunpack.c.l.b16 %v70
      %v116 = vunpack.c.l.b16 %v71
      %v117 = vunpack.c.l.b16 %v72
      %v118 = vunpack.c.l.b16 %v73
      %v119 = vunpack.c.l.b16 %v74
      %v120 = vunpack.c.l.b16 %v75
      %v121 = vunpack.c.l.b16 %v76
      %v122 = vunpack.c.l.b16 %v77
      %v123 = vunpack.c.l.b16 %v78
      %v124 = vunpack.c.l.b16 %v79
      %v125 = vunpack.c.l.b16 %v80
      %v126 = vunpack.c.l.b16 %v81
      %v127 = vunpack.c.l.b16 %v82
      %v128 = vunpack.c.l.b16 %v83
      %v129 = vunpack.c.l.b16 %v84
      %v130 = vpack.c.b16 %v115, %v114
      %v131 = vpack.c.b16 %v117, %v116
      %v132 = vpack.c.b16 %v119, %v118
      %v133 = vpack.c.b16 %v121, %v120
      %v134 = vpack.c.b16 %v123, %v122
      %v135 = vpack.c.b16 %v125, %v124
      %v136 = vpack.c.b16 %v127, %v126
      %v137 = vpack.c.b16 %v129, %v128
      %146 = vmatprep.subr.bf16.mxu0 0
      %147 = vmatpush1.bf16.msra.mxu0 %v130
      %148 = vmatprep.subr.bf16.mxu0 0
      %149 = vmatpush1.bf16.msra.mxu0 %v131
      %150 = vmatprep.subr.bf16.mxu0 0
      %151 = vmatpush1.bf16.msra.mxu0 %v132
      %152 = vmatprep.subr.bf16.mxu0 0
      %153 = vmatpush1.bf16.msra.mxu0 %v133
      %154 = vmatprep.subr.bf16.mxu0 0
      %155 = vmatpush1.bf16.msra.mxu0 %v134
      %156 = vmatprep.subr.bf16.mxu0 0
      %157 = vmatpush1.bf16.msra.mxu0 %v135
      %158 = vmatprep.subr.bf16.mxu0 0
      %159 = vmatpush1.bf16.msra.mxu0 %v136
      %160 = vmatprep.subr.bf16.mxu0 0
      %161 = vmatpush1.bf16.msra.mxu0 %v137
      %162 = vmatprep.subr.bf16.mxu0 0
      %163 = vmatpush1.bf16.msra.mxu0 0
      %164 = vmatprep.subr.bf16.mxu0 0
      %165 = vmatpush1.bf16.msra.mxu0 0
      %166 = vmatprep.subr.bf16.mxu0 0
      %167 = vmatpush1.bf16.msra.mxu0 0
      %168 = vmatprep.subr.bf16.mxu0 0
      %169 = vmatpush1.bf16.msra.mxu0 0
      %170 = vmatprep.subr.bf16.mxu0 0
      %171 = vmatpush1.bf16.msra.mxu0 0
      %172 = vmatprep.subr.bf16.mxu0 0
      %173 = vmatpush1.bf16.msra.mxu0 0
      %174 = vmatprep.subr.bf16.mxu0 0
      %175 = vmatpush1.bf16.msra.mxu0 0
      %176 = vmatprep.subr.bf16.mxu0 0
      %177 = vmatpush1.bf16.msra.mxu0 0
      %178 = vmatprep.mubr.bf16.mxu0 0
      %179 = vmatmul.mubr.bf16.gmra.mrb[0].mxu0 %v96
      %v180 = vpop.f32.mrb[0].mxu0
      %v181 = vadd.f32 %v90, %v180
      %v182 = vpop.f32.mrb[0].mxu0
      %v183 = vpop.f32.mrb[0].mxu0
      %v184 = vadd.f32 %v90, %v183
      %v185 = vpop.f32.mrb[0].mxu0
      %186 = vdwg.mxu0
      %v187 = vmax.f32 %v181, 0.0
      %v188 = vmax.f32 %v184, 0.0
      %v189 = vpack.c.bf16 %v188, %v187
      %190 = vst [vmem:[#allocation2] sm:$0xff] %v189
    $region37: #{tpu_custom_call.1} parent=1 // pred_fallthru
      _
    %v191 = vld [vmem:[#allocation2] sm:$0xff]
    %v192 = vld [vmem:[#allocation9] sm:$0xf]
    %v193 = vld [vmem:[#allocation9 + $0x4] sm:$0xf]
    %v194 = vld [vmem:[#allocation9 + $0x8] sm:$0xf]
    %v195 = vld [vmem:[#allocation9 + $0xc] sm:$0xf]
    %v196 = vld [vmem:[#allocation9 + $0x10] sm:$0xf]
    %v197 = vld [vmem:[#allocation9 + $0x14] sm:$0xf]
    %v198 = vld [vmem:[#allocation9 + $0x18] sm:$0xf]
    %v199 = vld [vmem:[#allocation9 + $0x1c] sm:$0xf]
    %v200 = vld [vmem:[#allocation9 + $0x20] sm:$0xf]
    %v201 = vld [vmem:[#allocation9 + $0x24] sm:$0xf]
    %v202 = vld [vmem:[#allocation9 + $0x28] sm:$0xf]
    %v203 = vld [vmem:[#allocation9 + $0x2c] sm:$0xf]
    %v204 = vld [vmem:[#allocation9 + $0x30] sm:$0xf]
    %v205 = vld [vmem:[#allocation9 + $0x34] sm:$0xf]
    %v206 = vld [vmem:[#allocation9 + $0x38] sm:$0xf]
    %v207 = vld [vmem:[#allocation9 + $0x3c] sm:$0xf]
    %v224 = vunpack.c.l.b16 %v192
    %v225 = vunpack.c.l.b16 %v193
    %v226 = vunpack.c.l.b16 %v194
    %v227 = vunpack.c.l.b16 %v195
    %v228 = vunpack.c.l.b16 %v196
    %v229 = vunpack.c.l.b16 %v197
    %v230 = vunpack.c.l.b16 %v198
    %v231 = vunpack.c.l.b16 %v199
    %v232 = vunpack.c.l.b16 %v200
    %v233 = vunpack.c.l.b16 %v201
    %v234 = vunpack.c.l.b16 %v202
    %v235 = vunpack.c.l.b16 %v203
    %v236 = vunpack.c.l.b16 %v204
    %v237 = vunpack.c.l.b16 %v205
    %v238 = vunpack.c.l.b16 %v206
    %v239 = vunpack.c.l.b16 %v207
    %v240 = vpack.c.b16 %v225, %v224
    %v241 = vpack.c.b16 %v227, %v226
    %v242 = vpack.c.b16 %v229, %v228
    %v243 = vpack.c.b16 %v231, %v230
    %v244 = vpack.c.b16 %v233, %v232
    %v245 = vpack.c.b16 %v235, %v234
    %v246 = vpack.c.b16 %v237, %v236
    %v247 = vpack.c.b16 %v239, %v238
    %256 = vmatprep.subr.bf16.mxu0 0
    %257 = vmatpush1.bf16.msra.mxu0 %v240
    %258 = vmatprep.subr.bf16.mxu0 0
    %259 = vmatpush1.bf16.msra.mxu0 %v241
    %260 = vmatprep.subr.bf16.mxu0 0
    %261 = vmatpush1.bf16.msra.mxu0 %v242
    %262 = vmatprep.subr.bf16.mxu0 0
    %263 = vmatpush1.bf16.msra.mxu0 %v243
    %264 = vmatprep.subr.bf16.mxu0 0
    %265 = vmatpush1.bf16.msra.mxu0 %v244
    %266 = vmatprep.subr.bf16.mxu0 0
    %267 = vmatpush1.bf16.msra.mxu0 %v245
    %268 = vmatprep.subr.bf16.mxu0 0
    %269 = vmatpush1.bf16.msra.mxu0 %v246
    %270 = vmatprep.subr.bf16.mxu0 0
    %271 = vmatpush1.bf16.msra.mxu0 %v247
    %272 = vmatprep.subr.bf16.mxu0 0
    %273 = vmatpush1.bf16.msra.mxu0 0
    %274 = vmatprep.subr.bf16.mxu0 0
    %275 = vmatpush1.bf16.msra.mxu0 0
    %276 = vmatprep.subr.bf16.mxu0 0
    %277 = vmatpush1.bf16.msra.mxu0 0
    %278 = vmatprep.subr.bf16.mxu0 0
    %279 = vmatpush1.bf16.msra.mxu0 0
    %280 = vmatprep.subr.bf16.mxu0 0
    %281 = vmatpush1.bf16.msra.mxu0 0
    %282 = vmatprep.subr.bf16.mxu0 0
    %283 = vmatpush1.bf16.msra.mxu0 0
    %284 = vmatprep.subr.bf16.mxu0 0
    %285 = vmatpush1.bf16.msra.mxu0 0
    %286 = vmatprep.subr.bf16.mxu0 0
    %287 = vmatpush1.bf16.msra.mxu0 0
    %288 = vmatprep.mubr.bf16.mxu0 0
    %289 = vmatmul.mubr.bf16.gmra.mrb[0].mxu0 %v191
    %v290 = vpop.f32.mrb[0].mxu0
    %v291 = vadd.f32 0.0, %v290
    %v292 = vpop.f32.mrb[0].mxu0
    %v293 = vpop.f32.mrb[0].mxu0
    %v294 = vadd.f32 0.0, %v293
    %v295 = vpop.f32.mrb[0].mxu0
    %296 = vdwg.mxu0
    %p297 = scmp.eq.s32.totalorder 0, 0
    // Predicated region
    $region38: #{tpu_custom_call.1} parent=1 // pred_check
      %p298 = pneg %p297
    $region39: #{tpu_custom_call.1} parent=1 // pred_check_branch
      %300 = sbr.rel (%p298) target = $region41
    $region40: #{tpu_custom_call.1} parent=1 // pred_region
      %s301 = smul.u32 0, 16
      %s302 = scalar_lea.vmem [#allocation3], %s301
      %303 = vst [vmem:[%s302] sm:$0xff] %v291
      %304 = vst [vmem:[%s302 + $0x8] sm:$0xff] %v294
    $region41: #{tpu_custom_call.1} parent=1 // pred_fallthru
      _
    %p305 = scmp.gt.s32.totalorder 0, 0
    // Predicated region
    $region42: #{tpu_custom_call.1} parent=1 // pred_check
      %p306 = pneg %p305
    $region43: #{tpu_custom_call.1} parent=1 // pred_check_branch
      %308 = sbr.rel (%p306) target = $region45
    $region44: #{tpu_custom_call.1} parent=1 // pred_region
      %s309 = smul.u32 0, 16
      %s310 = scalar_lea.vmem [#allocation3], %s309
      %v311 = vld [vmem:[%s310] sm:$0xff]
      %v312 = vld [vmem:[%s310 + $0x8] sm:$0xff]
      %v313 = vadd.f32 %v311, %v291
      %v314 = vadd.f32 %v312, %v294
      %315 = vst [vmem:[%s310] sm:$0xff] %v313
      %316 = vst [vmem:[%s310 + $0x8] sm:$0xff] %v314
    $region45: #{tpu_custom_call.1} parent=1 // pred_fallthru
      _
    // Predicated region
    $region46: #{tpu_custom_call.1} parent=1 // pred_check
      %p317 = pneg %p297
    $region47: #{tpu_custom_call.1} parent=1 // pred_check_branch
      %319 = sbr.rel (%p317) target = $region49
    $region48: #{tpu_custom_call.1} parent=1 // pred_region
      %s320 = smul.u32 0, 16
      %s321 = scalar_lea.vmem [#allocation3], %s320
      %v322 = vld [vmem:[%s321] sm:$0xff]
      %v323 = vld [vmem:[%s321 + $0x8] sm:$0xff]
      %v324 = vld [vmem:[%s4] sm:$0x1]
      %v326 = vlaneseq
      %v327 = vshrl.u32 %v326, 7
      %v328 = vsub.s32 0, %v327
      %v329 = vrot.slane %v324, %v328
      %v331 = vadd.f32 %v322, %v329
      %v332 = vadd.f32 %v323, %v329
      %333 = vst [vmem:[#allocation10] sm:$0xff] %v331
      %334 = vst [vmem:[#allocation10 + $0x8] sm:$0xff] %v332
    $region49: #{tpu_custom_call.1} parent=1 // pred_fallthru
      _
    // Predicated region
    $region50: #{tpu_custom_call.1} parent=1 // pred_check
      _
    $region51: #{tpu_custom_call.1} parent=1 // pred_check_branch
      %336 = sbr.rel (0) target = $region53
    $region52: #{tpu_custom_call.1} parent=1 // pred_region
      %s338 = ssub.s32 256, 256
      %339 = vsyncadd [#allocation6], %s338
      %s340 = sshll.u32 [#allocation10], 4
      %s341 = int_to_ptr.vmem [resolvable:$true] %s340
      %346 = dma.vmem_to_hbm [thread:$0]  %s341, 256, %s5, [#allocation6], 128, 128, 8
    $region53: #{tpu_custom_call.1} parent=1 // pred_fallthru
      _
    // Predicated region
    $region54: #{tpu_custom_call.1} parent=1 // pred_check
      _
    $region55: #{tpu_custom_call.1} parent=1 // pred_check_branch
      %348 = sbr.rel (0) target = $region57
    $region56: #{tpu_custom_call.1} parent=1 // pred_region
      %349 = dma.done [#allocation6], 256
    $region57: #{tpu_custom_call.1} parent=1 // pred_fallthru
      _
    %350 = vsyncpa [#allocation5], 1
    %351 = vsyncpa [#allocation8], 1
    %352 = vsyncpa [#allocation6], 1

</llo_original>
